<compile_context>
chip_gen: v6e
topology: v6e:2x2x1
jax: 0.10.0
libtpu: 0.0.40
codegen_flags: <defaults>
</compile_context>

<pallas_src>
import math

import jax
import jax.numpy as jnp
from jax.experimental import pallas as pl
from jax.experimental.pallas import tpu as pltpu


_NORM_CHUNK_E = 256  # row-slab size for the chunked column-norm reduction


def make_curricularface_kernel(s, tile_c, norm_chunk):
    def kernel(emb_ref, w_ref, aux_ref, label_ref, out_ref):
        j = pl.program_id(0)
        E = w_ref.shape[0]

        # --- column inv-norms of the raw weight tile ---------------------
        # Chunked f32 accumulation over static row slabs: avoids materializing
        # a full (E, tile_c) f32 copy (the big VMEM/ld-st cost flagged in the
        # review). Each slab temp is dead right after its reduction.
        sumsq = jnp.zeros((1, tile_c), jnp.float32)
        for start in range(0, E, norm_chunk):
            size = min(norm_chunk, E - start)
            blk = w_ref[pl.ds(start, size), :].astype(jnp.float32)
            sumsq = sumsq + jnp.sum(blk * blk, axis=0, keepdims=True)
        inv_norm = jax.lax.rsqrt(jnp.maximum(sumsq, 1e-30))  # guard 0/pad cols

        # --- cos_theta = (emb_norm @ w_raw) * inv_col_norm, clamped -------
        # MXU matmul on the RAW weight tile (bf16 in, f32 accumulate);
        # post-matmul rescale is O(B*tile_c) instead of O(E*tile_c).
        raw = jnp.dot(emb_ref[...], w_ref[...],
                      preferred_element_type=jnp.float32)
        cos = jnp.clip(raw * inv_norm, -1.0, 1.0)            # (B, tile_c) f32

        aux = aux_ref[...]                                    # (B, 3) f32
        ctm = aux[:, 0:1]                                     # cos_theta_m
        ftl_s = aux[:, 1:2]                                   # final_target_logit * s
        t = aux[:, 2:3]                                       # running t (bcast)

        # --- curricular hard-example reweighting: cos>ctm -> cos*(t+cos) ---
        hard = cos * (t + cos)
        base = jnp.where(cos > ctm, hard, cos)

        # --- label scatter + *s (label localized to this tile: (B,1) op) ---
        label_local = label_ref[...] - j * tile_c             # (B, 1) int32
        col_ids = jax.lax.broadcasted_iota(jnp.int32, cos.shape, 1)
        out = jnp.where(col_ids == label_local, ftl_s, base * s)

        out_ref[...] = out.astype(out_ref.dtype)

    return kernel


def _vmem_budget_and_cap():
    """(tile-selection budget, physical per-core VMEM capacity)."""
    cap = 64 << 20  # conservative default = v7x per-TC VMEM
    try:
        cap = int(pltpu.get_tpu_info().vmem_capacity_bytes)
    except Exception:
        pass
    budget = min(48 << 20, max(cap - (8 << 20), 16 << 20))
    return budget, cap


def _tile_footprint_bytes(B, E, tile_c, w_item, emb_item, out_item,
                          norm_chunk, n_weight_bufs):
    """Real VMEM footprint of one grid step (includes in-kernel f32 temps)."""
    return (n_weight_bufs * E * tile_c * w_item       # weight multi-buffer
            + 2 * B * tile_c * out_item               # output double buffer
            + 2 * B * E * emb_item                    # resident embeddings (worst case x2)
            + 2 * min(E, norm_chunk) * tile_c * 4     # f32 slab temps of the norm loop
            + 6 * B * tile_c * 4                      # live f32 epilogue values
            + 8 * tile_c * 4)                         # (1, tile_c) reductions


def _choose_tile_c(C, E, B, w_item, emb_item, out_item, budget):
    """Largest lane-dense class tile whose real footprint fits the budget.

    Among candidates with minimal total padded width (least wasted HBM
    traffic), prefer an even grid length (balanced split across v7x's two
    TensorCores), then the largest tile (fewest ~0.35 us grid steps)."""
    c_ceil = pl.cdiv(max(C, 256), 256) * 256
    fitting = []
    for cand in (8192, 4096, 2048, 1024, 512, 256):
        if cand > c_ceil:
            continue
        fp = _tile_footprint_bytes(B, E, cand, w_item, emb_item, out_item,
                                   _NORM_CHUNK_E, 3)
        if fp <= budget:
            fitting.append(cand)
    if not fitting:
        return 256  # minimum MXU-friendly width (avoid the 128 fallback)
    best = None
    for cand in fitting:
        n_tiles = pl.cdiv(C, cand)
        c_pad = n_tiles * cand
        even = 0 if (n_tiles >= 2 and n_tiles % 2 == 0) else 1
        key = (c_pad, even, -cand)
        if best is None or key < best[0]:
            best = (key, cand)
    return best[1]


def _weight_block_spec(block_shape, index_map, n_bufs):
    """Weight-stream BlockSpec, triple-buffered when supported/useful."""
    if n_bufs > 2 and hasattr(pl, "Buffered"):
        try:
            return pl.BlockSpec(block_shape, index_map,
                                pipeline_mode=pl.Buffered(n_bufs))
        except TypeError:
            pass  # older BlockSpec signature: fall back to default buffering
    return pl.BlockSpec(block_shape, index_map)


def curricular_face_forward(embeddings, weight, label, t=0.0, age=None,
                            s=64.0, m=0.5, tile_c=None,
                            compute_dtype=jnp.bfloat16,
                            out_dtype=jnp.bfloat16):
    """embeddings: (B, E), weight: (E, C), label: (B,) int, t: running scalar.

    Returns (logits (B, C) in out_dtype, new_t) — new_t mirrors the PyTorch
    `self.t` buffer update (t = 0.01*mean(target_logit) + 0.99*t).

    compute_dtype=bf16 (default) halves the HBM weight bytes and runs the MXU
    at full bf16 rate; pass float32 for bit-accurate parity with the f32
    reference (then the kernel is HBM-bound on 4 B/elem weights).
    `age` is accepted for signature parity but, as in the PyTorch module,
    unused."""
    del age
    B, E = embeddings.shape
    E2, C = weight.shape
    assert E == E2

    cos_m, sin_m = math.cos(m), math.sin(m)
    threshold = math.cos(math.pi - m)
    mm = math.sin(math.pi - m) * m

    # ---- per-row prep in f32 (cheap O(B*E); hoisted out of the kernel) ----
    emb32 = embeddings.astype(jnp.float32)
    emb_norm = emb32 * jax.lax.rsqrt(jnp.sum(emb32 * emb32, axis=1, keepdims=True))

    label = label.astype(jnp.int32)
    w_lab = jnp.take(weight, label, axis=1).astype(jnp.float32)           # (E, B)
    w_lab_n = w_lab * jax.lax.rsqrt(jnp.sum(w_lab * w_lab, axis=0, keepdims=True))
    target_logit = jnp.clip(
        jnp.sum(emb_norm * w_lab_n.T, axis=1, keepdims=True), -1.0, 1.0)  # (B, 1)

    sin_theta = jnp.sqrt(1.0 - target_logit * target_logit)
    cos_theta_m = target_logit * cos_m - sin_theta * sin_m
    final_target_logit = jnp.where(target_logit > threshold,
                                   cos_theta_m, target_logit - mm)
    new_t = jnp.mean(target_logit) * 0.01 + 0.99 * jnp.asarray(t, jnp.float32)

    # ---- chip-aware tiling over the class axis ----
    budget, cap = _vmem_budget_and_cap()
    w_item = jnp.dtype(compute_dtype).itemsize
    emb_item = w_item
    out_item = jnp.dtype(out_dtype).itemsize
    if tile_c is None:
        tile_c = _choose_tile_c(C, E, B, w_item, emb_item, out_item, budget)
    assert tile_c % 128 == 0, "tile_c must be lane-aligned (multiple of 128)"

    n_tiles = pl.cdiv(C, tile_c)
    C_pad = n_tiles * tile_c

    weight_c = weight.astype(compute_dtype)
    if C_pad != C:
        weight_c = jnp.pad(weight_c, ((0, 0), (0, C_pad - C)))
    emb_in = emb_norm.astype(compute_dtype)

    # Packed per-row aux: [cos_theta_m, final_target_logit * s, t]  (B, 3) f32.
    aux = jnp.concatenate(
        [cos_theta_m, final_target_logit * s, jnp.broadcast_to(new_t, (B, 1))],
        axis=1).astype(jnp.float32)
    label2d = label.reshape(B, 1)

    footprint = _tile_footprint_bytes(B, E, tile_c, w_item, emb_item, out_item,
                                      _NORM_CHUNK_E, 3)
    vmem_limit = int(min(cap - (4 << 20), max(footprint + (4 << 20), 32 << 20)))

    kernel = make_curricularface_kernel(float(s), tile_c, _NORM_CHUNK_E)
    w_spec = _weight_block_spec((E, tile_c), lambda j: (0, j),
                                3 if n_tiles >= 3 else 2)

    out = pl.pallas_call(
        kernel,
        out_shape=jax.ShapeDtypeStruct((B, C_pad), out_dtype),
        grid_spec=pltpu.PrefetchScalarGridSpec(
            num_scalar_prefetch=0,
            grid=(n_tiles,),
            in_specs=[
                # Grid-invariant inputs (constant index_map -> fetched once).
                pl.BlockSpec((B, E), lambda j: (0, 0)),   # normalized embeddings
                w_spec,                                   # streamed raw weight tile
                pl.BlockSpec((B, 3), lambda j: (0, 0)),   # packed [ctm, ftl*s, t]
                pl.BlockSpec((B, 1), lambda j: (0, 0)),   # labels
            ],
            out_specs=pl.BlockSpec((B, tile_c), lambda j: (0, j)),
        ),
        compiler_params=pltpu.CompilerParams(
            dimension_semantics=("parallel",),   # class tiles split across TCs (v7x)
            vmem_limit_bytes=vmem_limit),
    )(emb_in, weight_c, aux, label2d)

    if C_pad != C:
        out = out[:, :C]
    return out, new_t


def curricular_face_reference(embeddings, weight, label, t=0.0, s=64.0, m=0.5):
    """Pure-JAX reference mirroring the PyTorch forward exactly (f32)."""
    cos_m, sin_m = math.cos(m), math.sin(m)
    threshold = math.cos(math.pi - m)
    mm = math.sin(math.pi - m) * m

    emb_n = embeddings / jnp.linalg.norm(embeddings, axis=1, keepdims=True)
    w_n = weight / jnp.linalg.norm(weight, axis=0, keepdims=True)
    cos_theta = jnp.clip(emb_n @ w_n, -1.0, 1.0)

    B = embeddings.shape[0]
    rows = jnp.arange(B)
    target_logit = cos_theta[rows, label][:, None]
    sin_theta = jnp.sqrt(1.0 - target_logit ** 2)
    cos_theta_m = target_logit * cos_m - sin_theta * sin_m
    mask = cos_theta > cos_theta_m
    final_target_logit = jnp.where(target_logit > threshold,
                                   cos_theta_m, target_logit - mm)
    new_t = jnp.mean(target_logit) * 0.01 + 0.99 * jnp.asarray(t, jnp.float32)
    hard = cos_theta * (new_t + cos_theta)
    cos_theta = jnp.where(mask, hard, cos_theta)
    cos_theta = cos_theta.at[rows, label].set(final_target_logit[:, 0])
    return cos_theta * s, new_t


if __name__ == "__main__":
    B, E, C = 8, 64, 256          # small, deterministic shapes
    key = jax.random.PRNGKey(0)
    k_emb, k_w, k_lab = jax.random.split(key, 3)

    embeddings = jax.random.normal(k_emb, (B, E), dtype=jnp.float32)
    weight = 0.01 * jax.random.normal(k_w, (E, C), dtype=jnp.float32)  # nn.init.normal_(std=0.01)
    label = jax.random.randint(k_lab, (B,), 0, C, dtype=jnp.int32)
    t0 = 0.0                                                           # buffer starts at zeros

    # 1) Full-precision path: tight check against the pure-JAX reference.
    out32, new_t = curricular_face_forward(
        embeddings, weight, label, t=t0,
        compute_dtype=jnp.float32, out_dtype=jnp.float32)
    out32 = jax.block_until_ready(out32)
    ref, ref_t = curricular_face_reference(embeddings, weight, label, t=t0)
    assert out32.shape == (B, C)
    assert jnp.allclose(out32, ref, atol=2e-3, rtol=2e-3), "mismatch vs reference (f32)"
    assert jnp.allclose(new_t, ref_t, atol=1e-6), "t buffer update mismatch"

    # 2) Default production config (bf16 compute + bf16 out): runs clean,
    #    finite.  (bf16 cos near the hard-example threshold may flip the mask
    #    vs an f32 reference, so only sanity-check this path.)
    out_bf, _ = curricular_face_forward(embeddings, weight, label, t=t0)
    out_bf = jax.block_until_ready(out_bf)
    assert out_bf.shape == (B, C) and out_bf.dtype == jnp.bfloat16
    assert bool(jnp.all(jnp.isfinite(out_bf.astype(jnp.float32))))

    # 3) Multi-tile grid: exercises the cross-tile label scatter and the
    #    Buffered(3) weight stream (grid length 4).
    C2 = 1024
    k_w2, k_lab2 = jax.random.split(jax.random.PRNGKey(1), 2)
    weight2 = 0.01 * jax.random.normal(k_w2, (E, C2), dtype=jnp.float32)
    label2 = jax.random.randint(k_lab2, (B,), 0, C2, dtype=jnp.int32)
    out2, new_t2 = curricular_face_forward(
        embeddings, weight2, label2, t=t0, tile_c=256,
        compute_dtype=jnp.float32, out_dtype=jnp.float32)
    out2 = jax.block_until_ready(out2)
    ref2, ref_t2 = curricular_face_reference(embeddings, weight2, label2, t=t0)
    assert jnp.allclose(out2, ref2, atol=2e-3, rtol=2e-3), "mismatch vs reference (multi-tile)"
    assert jnp.allclose(new_t2, ref_t2, atol=1e-6)

    print("KERNEL_OK")
</pallas_src>

<mosaic_0001>
module attributes {stable_mosaic.version = 11 : i64} {
  func.func @kernel(%arg0: i32, %arg1: memref<8x64xf32, #tpu.memory_space<vmem>>, %arg2: memref<64x256xf32, #tpu.memory_space<vmem>>, %arg3: memref<8x3xf32, #tpu.memory_space<vmem>>, %arg4: memref<8x1xi32, #tpu.memory_space<vmem>>, %arg5: memref<8x256xf32, #tpu.memory_space<vmem>>) attributes {dimension_semantics = [#tpu.dimension_semantics<parallel>], iteration_bounds = array<i64: 1>, scalar_prefetch = 0 : i64, scratch_operands = 0 : i64, tpu.core_type = #tpu.core_type<tc>, window_params = [{pipeline_mode = #tpu.pipeline_mode<synchronous>, transform_indices = @transform_0, window_bounds = array<i64: 8, 64>}, {transform_indices = @transform_1, window_bounds = array<i64: 64, 256>}, {pipeline_mode = #tpu.pipeline_mode<synchronous>, transform_indices = @transform_2, window_bounds = array<i64: 8, 3>}, {pipeline_mode = #tpu.pipeline_mode<synchronous>, transform_indices = @transform_3, window_bounds = array<i64: 8, 1>}, {transform_indices = @transform_4, window_bounds = array<i64: 8, 256>}]} {
    %cst = arith.constant 0.000000e+00 : f32
    %0 = vector.broadcast %cst : f32 to vector<1x256xf32>
    %c0 = arith.constant 0 : index
    %c0_0 = arith.constant 0 : index
    %1 = vector.load %arg2[%c0, %c0_0] : memref<64x256xf32, #tpu.memory_space<vmem>>, vector<64x256xf32>
    %2 = arith.mulf %1, %1 : vector<64x256xf32>
    %cst_1 = arith.constant dense<0.000000e+00> : vector<256xf32>
    %3 = vector.multi_reduction <add>, %2, %cst_1 [0] : vector<64x256xf32> to vector<256xf32>
    %4 = vector.shape_cast %3 : vector<256xf32> to vector<1x256xf32>
    %5 = arith.addf %0, %4 : vector<1x256xf32>
    %cst_2 = arith.constant 1.000000e-30 : f32
    %6 = vector.broadcast %cst_2 : f32 to vector<1x256xf32>
    %7 = arith.maximumf %5, %6 : vector<1x256xf32>
    %8 = math.rsqrt %7 : vector<1x256xf32>
    %c0_3 = arith.constant 0 : index
    %c0_4 = arith.constant 0 : index
    %9 = vector.load %arg1[%c0_3, %c0_4] : memref<8x64xf32, #tpu.memory_space<vmem>>, vector<8x64xf32>
    %c0_5 = arith.constant 0 : index
    %c0_6 = arith.constant 0 : index
    %10 = vector.load %arg2[%c0_5, %c0_6] : memref<64x256xf32, #tpu.memory_space<vmem>>, vector<64x256xf32>
    %cst_7 = arith.constant dense<0.000000e+00> : vector<8x256xf32>
    %11 = tpu.matmul %9, %10, %cst_7 {dimension_numbers = #tpu.dot_dimension_numbers<[1], [0], [0], [1], [0, 0, 1, 1], [], []>} : vector<8x64xf32>, vector<64x256xf32>, vector<8x256xf32> -> vector<8x256xf32>
    %12 = vector.broadcast %8 : vector<1x256xf32> to vector<8x256xf32>
    %13 = arith.mulf %11, %12 : vector<8x256xf32>
    %cst_8 = arith.constant -1.000000e+00 : f32
    %cst_9 = arith.constant 1.000000e+00 : f32
    %14 = vector.broadcast %cst_8 : f32 to vector<8x256xf32>
    %15 = arith.maximumf %14, %13 : vector<8x256xf32>
    %16 = vector.broadcast %cst_9 : f32 to vector<8x256xf32>
    %17 = arith.minimumf %16, %15 : vector<8x256xf32>
    %c0_10 = arith.constant 0 : index
    %c0_11 = arith.constant 0 : index
    %18 = vector.load %arg3[%c0_10, %c0_11] : memref<8x3xf32, #tpu.memory_space<vmem>>, vector<8x3xf32>
    %19 = vector.extract_strided_slice %18 {offsets = [0, 0], sizes = [8, 1], strides = [1, 1]} : vector<8x3xf32> to vector<8x1xf32>
    %20 = vector.extract_strided_slice %18 {offsets = [0, 1], sizes = [8, 1], strides = [1, 1]} : vector<8x3xf32> to vector<8x1xf32>
    %21 = vector.extract_strided_slice %18 {offsets = [0, 2], sizes = [8, 1], strides = [1, 1]} : vector<8x3xf32> to vector<8x1xf32>
    %22 = vector.broadcast %21 : vector<8x1xf32> to vector<8x256xf32>
    %23 = arith.addf %22, %17 : vector<8x256xf32>
    %24 = arith.mulf %17, %23 : vector<8x256xf32>
    %25 = vector.broadcast %19 : vector<8x1xf32> to vector<8x256xf32>
    %26 = arith.cmpf ogt, %17, %25 : vector<8x256xf32>
    %27 = arith.select %26, %24, %17 : vector<8x256xi1>, vector<8x256xf32>
    %c0_12 = arith.constant 0 : index
    %c0_13 = arith.constant 0 : index
    %28 = vector.load %arg4[%c0_12, %c0_13] : memref<8x1xi32, #tpu.memory_space<vmem>>, vector<8x1xi32>
    %c256_i32 = arith.constant 256 : i32
    %29 = arith.muli %arg0, %c256_i32 : i32
    %30 = vector.broadcast %29 : i32 to vector<8x1xi32>
    %31 = arith.subi %28, %30 : vector<8x1xi32>
    %32 = tpu.iota {dimensions = array<i32: 1>} : vector<8x256xi32>
    %33 = vector.broadcast %31 : vector<8x1xi32> to vector<8x256xi32>
    %34 = arith.cmpi eq, %32, %33 : vector<8x256xi32>
    %cst_14 = arith.constant 6.400000e+01 : f32
    %35 = vector.broadcast %cst_14 : f32 to vector<8x256xf32>
    %36 = arith.mulf %27, %35 : vector<8x256xf32>
    %37 = vector.shape_cast %20 : vector<8x1xf32> to vector<8x1xf32>
    %38 = vector.broadcast %37 : vector<8x1xf32> to vector<8x256xf32>
    %39 = arith.select %34, %38, %36 : vector<8x256xi1>, vector<8x256xf32>
    %c0_15 = arith.constant 0 : index
    %c0_16 = arith.constant 0 : index
    %40 = vector.load %arg5[%c0_15, %c0_16] : memref<8x256xf32, #tpu.memory_space<vmem>>, vector<8x256xf32>
    tpu.vector_store %arg5[%c0_15, %c0_16], %39 {strides = array<i32>} : memref<8x256xf32, #tpu.memory_space<vmem>>, vector<8x256xf32>,
    return
  }
  func.func @transform_0(%arg0: i32) -> (i32, i32) {
    %c0_i32 = arith.constant 0 : i32
    %c0_i32_0 = arith.constant 0 : i32
    %c0_i32_1 = arith.constant 0 : i32
    return %c0_i32, %c0_i32_0 : i32, i32
  }
  func.func @transform_1(%arg0: i32) -> (i32, i32) {
    %c0_i32 = arith.constant 0 : i32
    %c0_i32_0 = arith.constant 0 : i32
    return %c0_i32, %arg0 : i32, i32
  }
  func.func @transform_2(%arg0: i32) -> (i32, i32) {
    %c0_i32 = arith.constant 0 : i32
    %c0_i32_0 = arith.constant 0 : i32
    %c0_i32_1 = arith.constant 0 : i32
    return %c0_i32, %c0_i32_0 : i32, i32
  }
  func.func @transform_3(%arg0: i32) -> (i32, i32) {
    %c0_i32 = arith.constant 0 : i32
    %c0_i32_0 = arith.constant 0 : i32
    %c0_i32_1 = arith.constant 0 : i32
    return %c0_i32, %c0_i32_0 : i32, i32
  }
  func.func @transform_4(%arg0: i32) -> (i32, i32) {
    %c0_i32 = arith.constant 0 : i32
    %c0_i32_0 = arith.constant 0 : i32
    return %c0_i32, %arg0 : i32, i32
  }
}

</mosaic_0001>

<llo_original>
// kernel: tpu_custom_call.1
$region0: #{tpu_custom_call.1}
  #allocation0 [shape = 'u32[]', space=smem, size = 0x4, offset = 0x4, fixed_abs, tag = 'smem constant byte address 0x4 - core index']
  #allocation1 [shape = 'u32[144,128]{1,0:T(1,128)}', space=vmem, size = 0x12000, scoped, tag = 'internal scratch']
  %s0 = inlined_call_operand.vmem [shape: f32[8,64], index: 0, kind: input, shape index: {}]
  %s1 = inlined_call_operand.hbm [shape: f32[64,256], index: 1, kind: input, shape index: {}]
  %s2 = inlined_call_operand.vmem [shape: f32[8,3], index: 2, kind: input, shape index: {}]
  %s3 = inlined_call_operand.vmem [shape: s32[8,1], index: 3, kind: input, shape index: {}]
  %s4 = inlined_call_operand.hbm [shape: f32[8,256], index: 4, kind: output, shape index: {}]
  %s5 = sld [smem:[#allocation0]]
  $region30: #{tpu_custom_call.1} parent=0
    _
  %s7 = ssub.s32 1, %s5
  %s8 = scalar_select 0, %s7, %s5
  $region1: #{tpu_custom_call.1} parent=0
    #allocation2 [shape = 'u8[65536]{0}', space=vmem, size = 0x10000, scoped, tag = 'input window, operand 1, single buffered']
    #allocation3 [shape = 's32[1]{0}', space=sflag, size = 0x4, scoped, tag = 'scoped memory for tpu_custom_call.1']
    #allocation4 [shape = 's32[1]{0}', space=sflag, size = 0x4, scoped, tag = 'scoped memory for tpu_custom_call.1']
    #allocation5 [shape = 'u8[8192]{0}', space=vmem, size = 0x2000, scoped, tag = 'output window, operand 0, single buffered']
    %9 = vsyncpa [#allocation3], 0
    %10 = vsyncpa [#allocation4], 0
    // Predicated region
    $region2: #{tpu_custom_call.1} parent=1 // pred_check
      _
    $region3: #{tpu_custom_call.1} parent=1 // pred_check_branch
      %12 = sbr.rel (0) target = $region5
    $region4: #{tpu_custom_call.1} parent=1 // pred_region
      _
    $region5: #{tpu_custom_call.1} parent=1 // pred_fallthru
      _
    // Predicated region
    $region6: #{tpu_custom_call.1} parent=1 // pred_check
      _
    $region7: #{tpu_custom_call.1} parent=1 // pred_check_branch
      %14 = sbr.rel (0) target = $region9
    $region8: #{tpu_custom_call.1} parent=1 // pred_region
      %s16 = ssub.s32 2048, 2048
      %17 = vsyncadd [#allocation3], %s16
      %s18 = sshll.u32 [#allocation2], 4
      %s19 = int_to_ptr.vmem [resolvable:$true] %s18
      %24 = dma.hbm_to_vmem [thread:$0]  %s1, 2048, %s19, [#allocation3], 256, 256, 16
    $region9: #{tpu_custom_call.1} parent=1 // pred_fallthru
      _
    // Predicated region
    $region10: #{tpu_custom_call.1} parent=1 // pred_check
      _
    $region11: #{tpu_custom_call.1} parent=1 // pred_check_branch
      %26 = sbr.rel (0) target = $region13
    $region12: #{tpu_custom_call.1} parent=1 // pred_region
      _
    $region13: #{tpu_custom_call.1} parent=1 // pred_fallthru
      _
    // Predicated region
    $region14: #{tpu_custom_call.1} parent=1 // pred_check
      _
    $region15: #{tpu_custom_call.1} parent=1 // pred_check_branch
      %28 = sbr.rel (0) target = $region17
    $region16: #{tpu_custom_call.1} parent=1 // pred_region
      _
    $region17: #{tpu_custom_call.1} parent=1 // pred_fallthru
      _
    // Predicated region
    $region18: #{tpu_custom_call.1} parent=1 // pred_check
      _
    $region19: #{tpu_custom_call.1} parent=1 // pred_check_branch
      %30 = sbr.rel (0) target = $region21
    $region20: #{tpu_custom_call.1} parent=1 // pred_region
      %31 = dma.done [#allocation3], 2048
    $region21: #{tpu_custom_call.1} parent=1 // pred_fallthru
      _
    %v32 = vld [vmem:[#allocation2] sm:$0xff]
    %v33 = vld [vmem:[#allocation2 + $0x8] sm:$0xff]
    %v34 = vld [vmem:[#allocation2 + $0x10] sm:$0xff]
    %v35 = vld [vmem:[#allocation2 + $0x18] sm:$0xff]
    %v36 = vld [vmem:[#allocation2 + $0x20] sm:$0xff]
    %v37 = vld [vmem:[#allocation2 + $0x28] sm:$0xff]
    %v38 = vld [vmem:[#allocation2 + $0x30] sm:$0xff]
    %v39 = vld [vmem:[#allocation2 + $0x38] sm:$0xff]
    %v40 = vld [vmem:[#allocation2 + $0x40] sm:$0xff]
    %v41 = vld [vmem:[#allocation2 + $0x48] sm:$0xff]
    %v42 = vld [vmem:[#allocation2 + $0x50] sm:$0xff]
    %v43 = vld [vmem:[#allocation2 + $0x58] sm:$0xff]
    %v44 = vld [vmem:[#allocation2 + $0x60] sm:$0xff]
    %v45 = vld [vmem:[#allocation2 + $0x68] sm:$0xff]
    %v46 = vld [vmem:[#allocation2 + $0x70] sm:$0xff]
    %v47 = vld [vmem:[#allocation2 + $0x78] sm:$0xff]
    %v48 = vmul.f32 %v32, %v32
    %v49 = vmul.f32 %v33, %v33
    %v50 = vmul.f32 %v34, %v34
    %v51 = vmul.f32 %v35, %v35
    %v52 = vmul.f32 %v36, %v36
    %v53 = vmul.f32 %v37, %v37
    %v54 = vmul.f32 %v38, %v38
    %v55 = vmul.f32 %v39, %v39
    %v56 = vmul.f32 %v40, %v40
    %v57 = vmul.f32 %v41, %v41
    %v58 = vmul.f32 %v42, %v42
    %v59 = vmul.f32 %v43, %v43
    %v60 = vmul.f32 %v44, %v44
    %v61 = vmul.f32 %v45, %v45
    %v62 = vmul.f32 %v46, %v46
    %v63 = vmul.f32 %v47, %v47
    %v64 = vadd.f32 %v48, %v50
    %v65 = vadd.f32 %v64, %v52
    %v66 = vadd.f32 %v65, %v54
    %v67 = vadd.f32 %v66, %v56
    %v68 = vadd.f32 %v67, %v58
    %v69 = vadd.f32 %v68, %v60
    %v70 = vadd.f32 %v69, %v62
    %v71 = vrot.slane %v70, 4
    %v72 = vadd.f32 %v70, %v71
    %v73 = vrot.slane %v72, 2
    %v74 = vadd.f32 %v72, %v73
    %v75 = vrot.slane %v74, 1
    %v76 = vadd.f32 %v74, %v75
    %v77 = vadd.f32 %v49, %v51
    %v78 = vadd.f32 %v77, %v53
    %v79 = vadd.f32 %v78, %v55
    %v80 = vadd.f32 %v79, %v57
    %v81 = vadd.f32 %v80, %v59
    %v82 = vadd.f32 %v81, %v61
    %v83 = vadd.f32 %v82, %v63
    %v84 = vrot.slane %v83, 4
    %v85 = vadd.f32 %v83, %v84
    %v86 = vrot.slane %v85, 2
    %v87 = vadd.f32 %v85, %v86
    %v88 = vrot.slane %v87, 1
    %v89 = vadd.f32 %v87, %v88
    %v90 = vadd.f32 %v76, 0.0
    %v91 = vadd.f32 %v89, 0.0
    %v92 = vmax.f32 %v90, 1e-30
    %v93 = vmax.f32 %v91, 1e-30
    %v94 = vrsqrt.pop %v92
    %v95 = vrsqrt.pop %v93
    %v96 = vld [vmem:[%s0] sm:$0xff]
    %vm97 = vcmask 523264
    %v99 = vsel %vm97, %v96, 0
    %101 = vmatprep.subr.mxu0 0.0
    %102 = vmatpush1.msra.mxu0 0.0
    %103 = vmatprep.subr.mxu0 0.0
    %104 = vmatpush1.msra.mxu0 0.0
    %105 = vmatprep.subr.mxu0 0.0
    %106 = vmatpush1.msra.mxu0 0.0
    %107 = vmatprep.subr.mxu0 0.0
    %108 = vmatpush1.msra.mxu0 0.0
    %109 = vmatprep.subr.mxu0 0.0
    %110 = vmatpush1.msra.mxu0 0.0
    %111 = vmatprep.subr.mxu0 0.0
    %112 = vmatpush1.msra.mxu0 0.0
    %113 = vmatprep.subr.mxu0 0.0
    %114 = vmatpush1.msra.mxu0 0.0
    %115 = vmatprep.subr.mxu0 0.0
    %116 = vmatpush1.msra.mxu0 0.0
    %117 = vmatprep.subr.mxu0 %v47
    %118 = vmatpush1.msra.mxu0 %v46
    %119 = vmatprep.subr.mxu0 %v45
    %120 = vmatpush1.msra.mxu0 %v44
    %121 = vmatprep.subr.mxu0 %v43
    %122 = vmatpush1.msra.mxu0 %v42
    %123 = vmatprep.subr.mxu0 %v41
    %124 = vmatpush1.msra.mxu0 %v40
    %125 = vmatprep.subr.mxu0 %v39
    %126 = vmatpush1.msra.mxu0 %v38
    %127 = vmatprep.subr.mxu0 %v37
    %128 = vmatpush1.msra.mxu0 %v36
    %129 = vmatprep.subr.mxu0 %v35
    %130 = vmatpush1.msra.mxu0 %v34
    %131 = vmatprep.subr.mxu0 %v33
    %132 = vmatpush1.msra.mxu0 %v32
    %133 = vmatprep.subr.mxu0 0.0
    %134 = vmatpush2.msra.mxu0 0.0
    %135 = vmatprep.subr.mxu0 0.0
    %136 = vmatpush2.msra.mxu0 0.0
    %137 = vmatprep.subr.mxu0 0.0
    %138 = vmatpush2.msra.mxu0 0.0
    %139 = vmatprep.subr.mxu0 0.0
    %140 = vmatpush2.msra.mxu0 0.0
    %141 = vmatprep.subr.mxu0 0.0
    %142 = vmatpush2.msra.mxu0 0.0
    %143 = vmatprep.subr.mxu0 0.0
    %144 = vmatpush2.msra.mxu0 0.0
    %145 = vmatprep.subr.mxu0 0.0
    %146 = vmatpush2.msra.mxu0 0.0
    %147 = vmatprep.subr.mxu0 0.0
    %148 = vmatpush2.msra.mxu0 0.0
    %149 = vmatprep.subr.mxu0 0.0
    %150 = vmatpush2.msra.mxu0 0.0
    %151 = vmatprep.subr.mxu0 0.0
    %152 = vmatpush2.msra.mxu0 0.0
    %153 = vmatprep.subr.mxu0 0.0
    %154 = vmatpush2.msra.mxu0 0.0
    %155 = vmatprep.subr.mxu0 0.0
    %156 = vmatpush2.msra.mxu0 0.0
    %157 = vmatprep.subr.mxu0 0.0
    %158 = vmatpush2.msra.mxu0 0.0
    %159 = vmatprep.subr.mxu0 0.0
    %160 = vmatpush2.msra.mxu0 0.0
    %161 = vmatprep.subr.mxu0 0.0
    %162 = vmatpush2.msra.mxu0 0.0
    %163 = vmatprep.subr.mxu0 0.0
    %164 = vmatpush2.msra.mxu0 0.0
    %165 = vmatprep.mubr.f32.mxu0 0.0
    %166 = vmatmul.mubr.f32.gmra.mxu0 %v99
    %v167 = vpop.f32.mrf.mxu0
    %v168 = vadd.f32 0.0, %v167
    %v169 = vpop.f32.mrf.mxu0
    %v170 = vadd.f32 0.0, %v169
    %171 = vdwg.mxu0
    %v172 = vmul.f32 %v168, %v94
    %v173 = vmul.f32 %v170, %v95
    %v174 = vmax.f32 %v172, -1.0
    %v175 = vmax.f32 %v173, -1.0
    %v176 = vmin.f32 %v174, 1.0
    %v177 = vmin.f32 %v175, 1.0
    %v178 = vld [vmem:[%s2] sm:$0xff]
    %180 = vset.pattern.permute.xlu0 2
    %181 = vperm.xlu0 %180, %v178
    %v182 = vpop.permute.xlu0 %181
    %v184 = vadd.f32 %v182, %v176
    %v185 = vadd.f32 %v182, %v177
    %v186 = vmul.f32 %v176, %v184
    %v187 = vmul.f32 %v177, %v185
    %188 = vset.pattern.permute.xlu0 0
    %189 = vperm.xlu0 %188, %v178
    %v190 = vpop.permute.xlu0 %189
    %vm192 = vcmp.gt.f32.partialorder %v176, %v190
    %vm193 = vcmp.gt.f32.partialorder %v177, %v190
    %v194 = vsel %vm192, %v186, %v176
    %v195 = vsel %vm193, %v187, %v177
    %v196 = vld [vmem:[%s3] sm:$0xff]
    %s197 = smul.u32 0, 256
    %v198 = vstv %s197
    %v199 = vsub.s32 %v196, %v198
    %v200 = vlaneseq
    %v201 = vand.u32 %v200, 127
    %v202 = vadd.s32 %v201, 128
    %203 = vset.pattern.permute.xlu0 0
    %204 = vperm.xlu0 %203, %v199
    %v205 = vpop.permute.xlu0 %204
    %vm206 = vcmp.eq.s32.totalorder %v201, %v205
    %vm207 = vcmp.eq.s32.totalorder %v202, %v205
    %v208 = vmul.f32 %v194, 64.0
    %v209 = vmul.f32 %v195, 64.0
    %210 = vset.pattern.permute.xlu0 1
    %211 = vperm.xlu0 %210, %v178
    %v212 = vpop.permute.xlu0 %211
    %v214 = vsel %vm206, %v212, %v208
    %v215 = vsel %vm207, %v212, %v209
    %216 = vst [vmem:[#allocation5] sm:$0xff] %v214
    %217 = vst [vmem:[#allocation5 + $0x8] sm:$0xff] %v215
    // Predicated region
    $region22: #{tpu_custom_call.1} parent=1 // pred_check
      _
    $region23: #{tpu_custom_call.1} parent=1 // pred_check_branch
      %219 = sbr.rel (0) target = $region25
    $region24: #{tpu_custom_call.1} parent=1 // pred_region
      %s221 = ssub.s32 256, 256
      %222 = vsyncadd [#allocation4], %s221
      %s224 = sshll.u32 [#allocation5], 4
      %s225 = int_to_ptr.vmem [resolvable:$true] %s224
      %227 = dma.vmem_to_hbm [thread:$0]  %s225, 256, %s4, [#allocation4]
    $region25: #{tpu_custom_call.1} parent=1 // pred_fallthru
      _
    // Predicated region
    $region26: #{tpu_custom_call.1} parent=1 // pred_check
      _
    $region27: #{tpu_custom_call.1} parent=1 // pred_check_branch
      %229 = sbr.rel (0) target = $region29
    $region28: #{tpu_custom_call.1} parent=1 // pred_region
      %230 = dma.done [#allocation4], 256
    $region29: #{tpu_custom_call.1} parent=1 // pred_fallthru
      _
    %231 = vsyncpa [#allocation3], 1
    %232 = vsyncpa [#allocation4], 1

</llo_original>
